<compile_context>
chip_gen: v5e
topology: v5e:2x2
jax: 0.10.0
libtpu: 0.0.40
codegen_flags: <defaults>
</compile_context>

<pallas_src>
import jax
import jax.numpy as jnp
from jax.experimental import pallas as pl
from jax.experimental.pallas import tpu as pltpu


def _round_up(x, m):
    return ((x + m - 1) // m) * m


_VMEM_LIMIT_BYTES = 48 * 1024 * 1024   # headroom for resident weight on v5e (16 MiB default)
_MASK_SCALE = 10000000.0               # torch's -1e7 masking constant


# --------------------------------------------------------------------------- kernels

def _make_head_kernel(tn, n_l):
    """train-mode head: masked-max-pooled logits for one batch element / one L-tile."""

    def kernel(x_ref, w_ref, mb_ref, out_ref):
        # x_ref   (1, S, H)   bf16   last_hidden_state slice (fetched once per b)
        # w_ref   (H, Lp)     bf16   full pre-transposed classifier weight (VMEM-resident)
        # mb_ref  (1, S, 1)   f32    additive mask bias: 0 (attended) / -1e7 (padded)
        # out_ref (1, 1, tn)  f32    masked-max pooled logits tile (bias added in wrapper)
        x = x_ref[0]                                           # (S, H)
        if n_l == 1:
            w = w_ref[...]                                     # static full slab
        else:
            start = pl.multiple_of(pl.program_id(1) * tn, 128)
            w = w_ref[:, pl.ds(start, tn)]                     # lane-aligned in-kernel slice
        logits = jnp.dot(x, w, preferred_element_type=jnp.float32)   # (S, tn) f32, MXU
        masked = logits + mb_ref[0]                                   # (S, 1) broadcast add
        out_ref[0] = jnp.max(masked, axis=0, keepdims=True)           # (1, tn)

    return kernel


def _make_linear_kernel(tn, n_l):
    """pretrain-mode head: plain (B,H)@(H,tn) GEMM tile (no mask/max)."""

    def kernel(x_ref, w_ref, out_ref):
        # x_ref (B, H) bf16 (resident), w_ref (H, Lp) bf16 (resident), out_ref (B, tn) f32
        if n_l == 1:
            w = w_ref[...]
        else:
            start = pl.multiple_of(pl.program_id(0) * tn, 128)
            w = w_ref[:, pl.ds(start, tn)]
        out_ref[...] = jnp.dot(x_ref[...], w, preferred_element_type=jnp.float32)

    return kernel


# --------------------------------------------------------------------------- wrappers

def prepare_classifier(weight, bias, target_tn=512):
    """Hoisted one-time prep: pad L to a lane-dense tile multiple, pre-transpose to (H, Lp) bf16."""
    L, H = weight.shape
    tn = min(target_tn, _round_up(L, 128))     # wide MXU-N tile, but never wider than padded L
    Lp = _round_up(L, tn)
    w_t = jnp.zeros((H, Lp), dtype=jnp.bfloat16)
    w_t = w_t.at[:, :L].set(weight.astype(jnp.bfloat16).T)
    return dict(w_t=w_t, bias=bias.astype(jnp.float32), L=L, Lp=Lp, tn=tn, H=H)


def _run_head(last_hidden, input_mask, params):
    """last_hidden [B,S,H], input_mask [B,S] -> pooled logits [B, L] (bias included)."""
    B, S, H = last_hidden.shape
    L, Lp, tn = params["L"], params["Lp"], params["tn"]
    n_l = Lp // tn

    x = last_hidden.astype(jnp.bfloat16)
    # additive mask bias: 0 where attended, -1e7 where masked (binary mask, as in torch)
    mbias = ((input_mask.astype(jnp.float32) - 1.0) * _MASK_SCALE).reshape(B, S, 1)

    pooled = pl.pallas_call(
        _make_head_kernel(tn, n_l),
        out_shape=jax.ShapeDtypeStruct((B, 1, Lp), jnp.float32),
        grid_spec=pltpu.PrefetchScalarGridSpec(
            num_scalar_prefetch=0,
            grid=(B, n_l),
            in_specs=[
                pl.BlockSpec((1, S, H), lambda b, j: (b, 0, 0)),   # hidden states (once per b)
                pl.BlockSpec((H, Lp),   lambda b, j: (0, 0)),      # weight: constant -> resident
                pl.BlockSpec((1, S, 1), lambda b, j: (b, 0, 0)),   # additive mask bias
            ],
            out_specs=pl.BlockSpec((1, 1, tn), lambda b, j: (b, 0, j)),
        ),
        compiler_params=pltpu.CompilerParams(
            dimension_semantics=("parallel", "parallel"),
            vmem_limit_bytes=_VMEM_LIMIT_BYTES),
    )(x, params["w_t"], mbias)

    # bias is constant over S -> add after the max; drop padded label columns first.
    return pooled.reshape(B, Lp)[:, :L] + params["bias"]


def _multilabel_soft_margin_loss(logits, labels):
    # torch.nn.MultiLabelSoftMarginLoss (mean over batch and labels)
    ls = jax.nn.log_sigmoid
    per = -(labels * ls(logits) + (1.0 - labels) * ls(-logits))
    return jnp.mean(per)


def forward_train(last_hidden, input_mask, params, labels=None):
    output = _run_head(last_hidden, input_mask, params)
    indice = jnp.argsort(-output, axis=-1)        # torch.sort(descending=True) indices
    if labels is None:
        return output, indice
    loss = _multilabel_soft_margin_loss(output, labels.astype(jnp.float32))
    return loss, output, indice


def forward_pretrain(last_hidden, input_mask, mask_idx, params, labels=None):
    B, S, H = last_hidden.shape
    L, Lp, tn = params["L"], params["Lp"], params["tn"]
    n_l = Lp // tn

    # Gather the [MASK] hidden state per batch element and batch B into the MXU M dimension.
    gathered = jnp.take_along_axis(
        last_hidden, mask_idx.reshape(B, 1, 1).astype(jnp.int32), axis=1)[:, 0, :]   # (B, H)
    x = gathered.astype(jnp.bfloat16)

    logits_p = pl.pallas_call(
        _make_linear_kernel(tn, n_l),
        out_shape=jax.ShapeDtypeStruct((B, Lp), jnp.float32),
        grid_spec=pltpu.PrefetchScalarGridSpec(
            num_scalar_prefetch=0,
            grid=(n_l,),
            in_specs=[
                pl.BlockSpec((B, H),  lambda j: (0, 0)),     # gathered states: resident
                pl.BlockSpec((H, Lp), lambda j: (0, 0)),     # weight: resident
            ],
            out_specs=pl.BlockSpec((B, tn), lambda j: (0, j)),
        ),
        compiler_params=pltpu.CompilerParams(
            dimension_semantics=("parallel",),
            vmem_limit_bytes=_VMEM_LIMIT_BYTES),
    )(x, params["w_t"])

    output = logits_p[:, :L] + params["bias"]
    indice = jnp.argsort(-output, axis=-1)
    if labels is None:
        return output, indice
    loss = _multilabel_soft_margin_loss(output, labels.astype(jnp.float32))
    return loss, output, indice


# --------------------------------------------------------------------------- reference

def _ref_train(last_hidden, input_mask, weight, bias, labels):
    # Pure-JAX reference of the torch 'train' forward (bf16 matmul inputs to mirror MXU dtype).
    x = last_hidden.astype(jnp.bfloat16).astype(jnp.float32)
    w = weight.astype(jnp.bfloat16).astype(jnp.float32)
    logits = x @ w.T + bias.astype(jnp.float32)
    m = input_mask.astype(jnp.float32)[..., None]
    out = (logits * m + (-_MASK_SCALE) * (1.0 - m)).max(axis=1)
    loss = _multilabel_soft_margin_loss(out, labels.astype(jnp.float32))
    return loss, out


if __name__ == "__main__":
    B, S, H, L = 2, 8, 32, 16     # batch, seq, hidden_size, n_labels (small test shapes)

    key = jax.random.PRNGKey(0)
    k1, k2, k3, k4 = jax.random.split(key, 4)

    last_hidden = jax.random.normal(k1, (B, S, H), dtype=jnp.float32)
    input_mask = jnp.array(
        [[1, 1, 1, 1, 1, 1, 1, 1],
         [1, 1, 1, 1, 1, 0, 0, 0]], dtype=jnp.float32)
    labels = jax.random.bernoulli(k2, 0.3, (B, L)).astype(jnp.float32)

    # classification_head parameters; prepared once (hoisted padding/transpose)
    weight = 0.05 * jax.random.normal(k3, (L, H), dtype=jnp.float32)
    bias = 0.01 * jax.random.normal(k4, (L,), dtype=jnp.float32)
    params = prepare_classifier(weight, bias)

    # ---- train mode ----
    loss, output, indice = forward_train(last_hidden, input_mask, params, labels)
    jax.block_until_ready((loss, output, indice))

    ref_loss, ref_out = _ref_train(last_hidden, input_mask, weight, bias, labels)
    assert output.shape == (B, L) and indice.shape == (B, L)
    assert jnp.allclose(output, ref_out, atol=1e-3, rtol=1e-3), "pooled logits mismatch"
    assert jnp.allclose(loss, ref_loss, atol=1e-4, rtol=1e-4), "loss mismatch"

    # ---- pretrain mode ----
    mask_idx = jnp.array([1, 3], dtype=jnp.int32)
    p_loss, p_out, p_ind = forward_pretrain(
        last_hidden, input_mask, mask_idx, params, labels)
    jax.block_until_ready((p_loss, p_out, p_ind))

    g = jnp.take_along_axis(last_hidden, mask_idx.reshape(B, 1, 1), axis=1)[:, 0, :]
    ref_p = (g.astype(jnp.bfloat16).astype(jnp.float32)
             @ weight.astype(jnp.bfloat16).astype(jnp.float32).T) + bias
    assert p_out.shape == (B, L) and p_ind.shape == (B, L)
    assert jnp.allclose(p_out, ref_p, atol=1e-3, rtol=1e-3), "pretrain logits mismatch"

    print("KERNEL_OK")
</pallas_src>

<mosaic_0001>
module attributes {stable_mosaic.version = 11 : i64} {
  func.func @kernel(%arg0: i32, %arg1: i32, %arg2: memref<1x8x32xbf16, #tpu.memory_space<vmem>>, %arg3: memref<32x128xbf16, #tpu.memory_space<vmem>>, %arg4: memref<1x8x1xf32, #tpu.memory_space<vmem>>, %arg5: memref<1x1x128xf32, #tpu.memory_space<vmem>>) attributes {dimension_semantics = [#tpu.dimension_semantics<parallel>, #tpu.dimension_semantics<parallel>], iteration_bounds = array<i64: 2, 1>, scalar_prefetch = 0 : i64, scratch_operands = 0 : i64, tpu.core_type = #tpu.core_type<tc>, window_params = [{transform_indices = @transform_0, window_bounds = array<i64: 1, 8, 32>}, {pipeline_mode = #tpu.pipeline_mode<synchronous>, transform_indices = @transform_1, window_bounds = array<i64: 32, 128>}, {transform_indices = @transform_2, window_bounds = array<i64: 1, 8, 1>}, {transform_indices = @transform_3, window_bounds = array<i64: 1, 1, 128>}]} {
    %c0 = arith.constant 0 : index
    %c0_0 = arith.constant 0 : index
    %c0_1 = arith.constant 0 : index
    %0 = vector.load %arg2[%c0, %c0_0, %c0_1] : memref<1x8x32xbf16, #tpu.memory_space<vmem>>, vector<1x8x32xbf16>
    %1 = vector.shape_cast %0 : vector<1x8x32xbf16> to vector<8x32xbf16>
    %c0_2 = arith.constant 0 : index
    %c0_3 = arith.constant 0 : index
    %2 = vector.load %arg3[%c0_2, %c0_3] : memref<32x128xbf16, #tpu.memory_space<vmem>>, vector<32x128xbf16>
    %cst = arith.constant dense<0.000000e+00> : vector<8x128xf32>
    %3 = tpu.matmul %1, %2, %cst {dimension_numbers = #tpu.dot_dimension_numbers<[1], [0], [0], [1], [0, 0, 1, 1], [], []>} : vector<8x32xbf16>, vector<32x128xbf16>, vector<8x128xf32> -> vector<8x128xf32>
    %c0_4 = arith.constant 0 : index
    %c0_5 = arith.constant 0 : index
    %c0_6 = arith.constant 0 : index
    %4 = vector.load %arg4[%c0_4, %c0_5, %c0_6] : memref<1x8x1xf32, #tpu.memory_space<vmem>>, vector<1x8x1xf32>
    %5 = vector.shape_cast %4 : vector<1x8x1xf32> to vector<8x1xf32>
    %6 = vector.broadcast %5 : vector<8x1xf32> to vector<8x128xf32>
    %7 = arith.addf %3, %6 : vector<8x128xf32>
    %cst_7 = arith.constant dense<0xFF800000> : vector<128xf32>
    %8 = vector.multi_reduction <maximumf>, %7, %cst_7 [0] : vector<8x128xf32> to vector<128xf32>
    %9 = vector.shape_cast %8 : vector<128xf32> to vector<1x128xf32>
    %c0_8 = arith.constant 0 : index
    %c0_9 = arith.constant 0 : index
    %c0_10 = arith.constant 0 : index
    %10 = vector.load %arg5[%c0_8, %c0_9, %c0_10] : memref<1x1x128xf32, #tpu.memory_space<vmem>>, vector<1x1x128xf32>
    %11 = vector.shape_cast %10 : vector<1x1x128xf32> to vector<1x128xf32>
    %12 = vector.shape_cast %9 : vector<1x128xf32> to vector<1x1x128xf32>
    tpu.vector_store %arg5[%c0_8, %c0_9, %c0_10], %12 {strides = array<i32>} : memref<1x1x128xf32, #tpu.memory_space<vmem>>, vector<1x1x128xf32>,
    return
  }
  func.func @transform_0(%arg0: i32, %arg1: i32) -> (i32, i32, i32) {
    %c0_i32 = arith.constant 0 : i32
    %c0_i32_0 = arith.constant 0 : i32
    %c0_i32_1 = arith.constant 0 : i32
    return %arg0, %c0_i32, %c0_i32_0 : i32, i32, i32
  }
  func.func @transform_1(%arg0: i32, %arg1: i32) -> (i32, i32) {
    %c0_i32 = arith.constant 0 : i32
    %c0_i32_0 = arith.constant 0 : i32
    %c0_i32_1 = arith.constant 0 : i32
    return %c0_i32, %c0_i32_0 : i32, i32
  }
  func.func @transform_2(%arg0: i32, %arg1: i32) -> (i32, i32, i32) {
    %c0_i32 = arith.constant 0 : i32
    %c0_i32_0 = arith.constant 0 : i32
    %c0_i32_1 = arith.constant 0 : i32
    return %arg0, %c0_i32, %c0_i32_0 : i32, i32, i32
  }
  func.func @transform_3(%arg0: i32, %arg1: i32) -> (i32, i32, i32) {
    %c0_i32 = arith.constant 0 : i32
    %c0_i32_0 = arith.constant 0 : i32
    return %arg0, %c0_i32, %arg1 : i32, i32, i32
  }
}

</mosaic_0001>

<llo_original>
// kernel: tpu_custom_call.1
$region0: #{tpu_custom_call.1}
  #allocation0 [shape = 'u32[]', space=smem, size = 0x4, offset = 0x4, fixed_abs, tag = 'smem constant byte address 0x4 - core index']
  #allocation1 [shape = 'u32[72,128]{1,0:T(1,128)}', space=vmem, size = 0x9000, scoped, tag = 'internal scratch']
  %s0 = inlined_call_operand.hbm [shape: bf16[2,8,32], index: 0, kind: input, shape index: {}]
  %s1 = inlined_call_operand.vmem [shape: bf16[32,128], index: 1, kind: input, shape index: {}]
  %s2 = inlined_call_operand.vmem [shape: f32[2,8,1], index: 2, kind: input, shape index: {}]
  %s3 = inlined_call_operand.hbm [shape: f32[2,1,128], index: 3, kind: output, shape index: {}]
  %s4 = sld [smem:[#allocation0]]
  $region49: #{tpu_custom_call.1} parent=0
    _
  %s6 = ssub.s32 1, %s4
  %s7 = scalar_select 0, %s6, %s4
  $region1: #{tpu_custom_call.1} parent=0
    #allocation2 [shape = 'u8[4096]{0}', space=vmem, size = 0x1000, scoped, tag = 'input window, operand 0']
    #allocation3 [shape = 's32[2]{0}', space=sflag, size = 0x8, scoped, tag = 'scoped memory for tpu_custom_call.1']
    #allocation4 [shape = 's32[2]{0}', space=sflag, size = 0x8, scoped, tag = 'scoped memory for tpu_custom_call.1']
    #allocation5 [shape = 'u8[1024]{0}', space=vmem, size = 0x400, scoped, tag = 'output window, operand 0']
    %8 = vsyncpa [#allocation3], 0
    %s9 = scalar_lea.sflag [#allocation3], 1
    %10 = vsyncpa %s9, 0
    %11 = vsyncpa [#allocation4], 0
    %s12 = scalar_lea.sflag [#allocation4], 1
    %13 = vsyncpa %s12, 0
    loop: start=0, step=1, limit=4
    $region2: #{tpu_custom_call.1} parent=1 // loop_pre_header
      _
    $region3: #{tpu_custom_call.1} parent=1 // loop_header
      %s15 = sphi 0, %s19
      %p16 = scmp.ge.s32.totalorder %s15, 4
      %s22 = sphi 0, %s34
      %s23 = sphi 0, %s30
      %s24 = sphi 0, %s22
      %s25 = sphi 0, %s23
      %s26 = sphi 0, %s24
      %s27 = sphi 0, %s25
      %s37 = sphi 0, %s39
      %s40 = sphi 0, %s37
      %s41 = sphi 0, %s40
      %s57 = sphi 0, %s41
      %s61 = sphi 0, %s61
      %s63 = sphi 0, %s61
      %s64 = sphi 0, %s63
      %s78 = sphi 0, %s64
      %s84 = sphi 0, %s86
      %s87 = sphi 0, %s84
      %s88 = sphi 0, %s87
      %s104 = sphi 0, %s88
      %s112 = sphi 0, %s114
      %s115 = sphi 0, %s112
      %s116 = sphi 0, %s115
      %s132 = sphi 0, %s116
    $region4: #{tpu_custom_call.1} parent=1 // loop_header_branch
      %18 = sbr.rel (%p16) target = $region8
    $region5: #{tpu_custom_call.1} parent=1 // loop_body
      %s20 = ssub.s32 %s15, 1
      %s21 = ssub.s32 %s15, 2
      %s28 = sadd.s32 1, %s23
      %p29 = scmp.ge.s32.totalorder %s28, 1
      %s30 = scalar_select %p29, 0, %s28
      %s31 = sadd.s32 1, %s22
      %s32 = scalar_select %p29, %s31, %s22
      %p33 = scmp.ge.s32.totalorder %s32, 2
      %s34 = scalar_select %p33, 0, %s32
      %s35 = ssub.s32 %s22, %s34
      %p36 = scmp.eq.s32.totalorder %s35, 0
      %s38 = sadd.s32 %s37, 1
      %s39 = scalar_select %p36, %s37, %s38
      %p42 = pneg %p36
      %p43 = scmp.eq.s32.totalorder %s15, 1
      %p44 = por %p42, %p43
      %p45 = scmp.ne.s32.totalorder %s37, %s40
      %p46 = scmp.eq.s32.totalorder %s15, 0
      %p47 = por %p45, %p46
      %p48 = scmp.ne.s32.totalorder %s37, %s40
      %p49 = scmp.eq.s32.totalorder %s20, 1
      %p50 = por %p48, %p49
      %p51 = scmp.ne.s32.totalorder %s40, %s41
      %p52 = scmp.eq.s32.totalorder %s20, 0
      %p53 = por %p51, %p52
      %p54 = scmp.ne.s32.totalorder %s40, %s41
      %p55 = scmp.eq.s32.totalorder %s21, 1
      %p56 = por %p54, %p55
      %p58 = scmp.ne.s32.totalorder %s41, %s57
      %p59 = scmp.eq.s32.totalorder %s21, 0
      %p60 = por %p58, %p59
      %s62 = sadd.s32 %s61, 1
      %p65 = scmp.eq.s32.totalorder %s15, 1
      %p66 = scmp.ne.s32.totalorder %s61, %s63
      %p67 = scmp.eq.s32.totalorder %s15, 0
      %p68 = por %p66, %p67
      %p69 = scmp.ne.s32.totalorder %s61, %s63
      %p70 = scmp.eq.s32.totalorder %s20, 1
      %p71 = por %p69, %p70
      %p72 = scmp.ne.s32.totalorder %s63, %s64
      %p73 = scmp.eq.s32.totalorder %s20, 0
      %p74 = por %p72, %p73
      %p75 = scmp.ne.s32.totalorder %s63, %s64
      %p76 = scmp.eq.s32.totalorder %s21, 1
      %p77 = por %p75, %p76
      %p79 = scmp.ne.s32.totalorder %s64, %s78
      %p80 = scmp.eq.s32.totalorder %s21, 0
      %p81 = por %p79, %p80
      %s82 = ssub.s32 %s22, %s34
      %p83 = scmp.eq.s32.totalorder %s82, 0
      %s85 = sadd.s32 %s84, 1
      %s86 = scalar_select %p83, %s84, %s85
      %p89 = pneg %p83
      %p90 = scmp.eq.s32.totalorder %s15, 1
      %p91 = por %p89, %p90
      %p92 = scmp.ne.s32.totalorder %s84, %s87
      %p93 = scmp.eq.s32.totalorder %s15, 0
      %p94 = por %p92, %p93
      %p95 = scmp.ne.s32.totalorder %s84, %s87
      %p96 = scmp.eq.s32.totalorder %s20, 1
      %p97 = por %p95, %p96
      %p98 = scmp.ne.s32.totalorder %s87, %s88
      %p99 = scmp.eq.s32.totalorder %s20, 0
      %p100 = por %p98, %p99
      %p101 = scmp.ne.s32.totalorder %s87, %s88
      %p102 = scmp.eq.s32.totalorder %s21, 1
      %p103 = por %p101, %p102
      %p105 = scmp.ne.s32.totalorder %s88, %s104
      %p106 = scmp.eq.s32.totalorder %s21, 0
      %p107 = por %p105, %p106
      %s108 = ssub.s32 %s22, %s34
      %s109 = ssub.s32 %s23, %s30
      %s110 = sor.u32 %s108, %s109
      %p111 = scmp.eq.s32.totalorder %s110, 0
      %s113 = sadd.s32 %s112, 1
      %s114 = scalar_select %p111, %s112, %s113
      %p117 = pneg %p111
      %p118 = scmp.eq.s32.totalorder %s15, 1
      %p119 = por %p117, %p118
      %p120 = scmp.ne.s32.totalorder %s112, %s115
      %p121 = scmp.eq.s32.totalorder %s15, 0
      %p122 = por %p120, %p121
      %p123 = scmp.ne.s32.totalorder %s112, %s115
      %p124 = scmp.eq.s32.totalorder %s20, 1
      %p125 = por %p123, %p124
      %p126 = scmp.ne.s32.totalorder %s115, %s116
      %p127 = scmp.eq.s32.totalorder %s20, 0
      %p128 = por %p126, %p127
      %p129 = scmp.ne.s32.totalorder %s115, %s116
      %p130 = scmp.eq.s32.totalorder %s21, 1
      %p131 = por %p129, %p130
      %p133 = scmp.ne.s32.totalorder %s116, %s132
      %p134 = scmp.eq.s32.totalorder %s21, 0
      %p135 = por %p133, %p134
      %p136 = scmp.le.s32.totalorder 1, %s15
      %p137 = scmp.lt.s32.totalorder %s15, 3
      %p138 = pnand %p136, %p137
      %p139 = pneg %p138
      // Predicated region
      $region9: #{tpu_custom_call.1} parent=5 // pred_check
        _
      $region10: #{tpu_custom_call.1} parent=5 // pred_check_branch
        %141 = sbr.rel (%p138) target = $region12
      $region11: #{tpu_custom_call.1} parent=5 // pred_region
        %s142 = ssub.s32 %s15, 1
        // Predicated region
        $region13: #{tpu_custom_call.1} parent=11 // pred_check
          %p143 = pneg %p74
        $region14: #{tpu_custom_call.1} parent=11 // pred_check_branch
          %145 = sbr.rel (%p143) target = $region16
        $region15: #{tpu_custom_call.1} parent=11 // pred_region
          _
        $region16: #{tpu_custom_call.1} parent=11 // pred_fallthru
          _
      $region12: #{tpu_custom_call.1} parent=5 // pred_fallthru
        _
      %p146 = scmp.lt.s32.totalorder %s15, 2
      // Predicated region
      $region17: #{tpu_custom_call.1} parent=5 // pred_check
        %p147 = pneg %p146
      $region18: #{tpu_custom_call.1} parent=5 // pred_check_branch
        %149 = sbr.rel (%p147) target = $region20
      $region19: #{tpu_custom_call.1} parent=5 // pred_region
        // Predicated region
        $region21: #{tpu_custom_call.1} parent=19 // pred_check
          %p150 = pneg %p47
        $region22: #{tpu_custom_call.1} parent=19 // pred_check_branch
          %152 = sbr.rel (%p150) target = $region24
        $region23: #{tpu_custom_call.1} parent=19 // pred_region
          %s153 = sand.u32 %s37, 1
          %s154 = scalar_lea.sflag [#allocation3], %s153
          %s155 = sand.u32 %s37, 1
          %s156 = smul.addr %s155, 4
          %s157 = scalar_lea.vmem [#allocation2], %s156
          %159 = vsyncadd %s154, 0
          %s160 = smul.addr %s22, 4
          %s161 = scalar_lea.hbm %s0, %s160
          %s163 = sshll.u32 %s161, 4
          %s164 = int_to_ptr.hbm [resolvable:$true] %s163
          %s165 = sshll.u32 %s157, 4
          %s166 = int_to_ptr.vmem [resolvable:$true] %s165
          %168 = dma.hbm_to_vmem [thread:$0]  %s164, 64, %s166, %s154
        $region24: #{tpu_custom_call.1} parent=19 // pred_fallthru
          _
        // Predicated region
        $region25: #{tpu_custom_call.1} parent=19 // pred_check
          %p169 = pneg %p94
        $region26: #{tpu_custom_call.1} parent=19 // pred_check_branch
          %171 = sbr.rel (%p169) target = $region28
        $region27: #{tpu_custom_call.1} parent=19 // pred_region
          %p172 = scmp.lt.s32.totalorder %s22, 1
          %s173 = scalar_select %p172, %s22, 1
          %s174 = smul.addr %s173, 8
          %s175 = scalar_lea.vmem %s2, %s174
        $region28: #{tpu_custom_call.1} parent=19 // pred_fallthru
          _
      $region20: #{tpu_custom_call.1} parent=5 // pred_fallthru
        _
      %p176 = scmp.le.s32.totalorder 1, %s15
      %p177 = scmp.lt.s32.totalorder %s15, 3
      %p178 = pnand %p176, %p177
      %p179 = pneg %p178
      // Predicated region
      $region29: #{tpu_custom_call.1} parent=5 // pred_check
        _
      $region30: #{tpu_custom_call.1} parent=5 // pred_check_branch
        %181 = sbr.rel (%p178) target = $region32
      $region31: #{tpu_custom_call.1} parent=5 // pred_region
        %s182 = ssub.s32 %s15, 1
        %s183 = sand.u32 %s40, 1
        %s184 = scalar_lea.sflag [#allocation3], %s183
        %s185 = sand.u32 %s40, 1
        %s186 = smul.addr %s185, 4
        %s187 = scalar_lea.vmem [#allocation2], %s186
        // Predicated region
        $region33: #{tpu_custom_call.1} parent=31 // pred_check
          %p188 = pneg %p53
        $region34: #{tpu_custom_call.1} parent=31 // pred_check_branch
          %190 = sbr.rel (%p188) target = $region36
        $region35: #{tpu_custom_call.1} parent=31 // pred_region
          %192 = dma.done %s184, 64
        $region36: #{tpu_custom_call.1} parent=31 // pred_fallthru
          _
        %s193 = sand.u32 %s40, 1
        %s194 = scalar_lea.sflag [#allocation3], %s193
        %s195 = sand.u32 %s40, 1
        %s196 = smul.addr %s195, 4
        %s197 = scalar_lea.vmem [#allocation2], %s196
        %p198 = pneg %p53
        %p199 = pneg %p50
        %p200 = pneg %p74
        %p201 = pneg %p71
        %p202 = scmp.lt.s32.totalorder %s24, 1
        %s203 = scalar_select %p202, %s24, 1
        %s204 = smul.addr %s203, 8
        %s205 = scalar_lea.vmem %s2, %s204
        %p206 = pneg %p100
        %p207 = pneg %p97
        %p208 = pneg %p128
        %p209 = pneg %p125
        %s210 = sand.u32 %s115, 1
        %s211 = scalar_lea.sflag [#allocation4], %s210
        %s212 = sand.u32 %s115, 1
        %s213 = scalar_lea.vmem [#allocation5], %s212
        %p214 = scmp.lt.s32.totalorder %s24, 1
        %s215 = scalar_select %p214, %s24, 1
        %s216 = smul.addr %s215, 8
        %s217 = scalar_lea.vmem %s2, %s216
        %v219 = vld [vmem:[%s187] sm:$0xf]
        %v220 = vld [vmem:[%s1] sm:$0xf]
        %v221 = vld [vmem:[%s1 + $0x4] sm:$0xf]
        %v222 = vld [vmem:[%s1 + $0x8] sm:$0xf]
        %v223 = vld [vmem:[%s1 + $0xc] sm:$0xf]
        %v224 = vld [vmem:[%s217] sm:$0xff]
        %226 = vset.pattern.permute.xlu0 0
        %227 = vperm.xlu0 %226, %v224
        %v228 = vpop.permute.xlu0 %227
        %v234 = vunpack.c.l.b16 %v220
        %v235 = vunpack.c.l.b16 %v221
        %v236 = vunpack.c.l.b16 %v222
        %v237 = vunpack.c.l.b16 %v223
        %v238 = vpack.c.b16 %v235, %v234
        %v239 = vpack.c.b16 %v237, %v236
        %vm242 = vcmask 261120
        %v244 = vsel %vm242, %v219, 0
        %246 = vmatpush.bf16.msra.mxu0 0
        %247 = vmatpush.bf16.msra.mxu0 0
        %248 = vmatpush.bf16.msra.mxu0 0
        %249 = vmatpush.bf16.msra.mxu0 0
        %250 = vmatpush.bf16.msra.mxu0 0
        %251 = vmatpush.bf16.msra.mxu0 0
        %252 = vmatpush.bf16.msra.mxu0 %v239
        %253 = vmatpush.bf16.msra.mxu0 %v238
        %254 = vmatmul.bf16.gmra.mxu0 %v244
        %v255 = vpop.f32.mrf.mxu0
        %v256 = vadd.f32 %v228, %v255
        %v257 = vpop.f32.mrf.mxu0
        %258 = vdwg.mxu0
        %v259 = vrot.slane %v256, 4
        %v260 = vmax.f32 %v256, %v259
        %v261 = vrot.slane %v260, 2
        %v262 = vmax.f32 %v260, %v261
        %v263 = vrot.slane %v262, 1
        %v264 = vmax.f32 %v262, %v263
        %265 = vst [vmem:[%s213] sm:$0x1] %v264
        %s266 = sand.u32 %s115, 1
        %s267 = scalar_lea.sflag [#allocation4], %s266
        %s268 = sand.u32 %s115, 1
        %s269 = scalar_lea.vmem [#allocation5], %s268
        // Predicated region
        $region37: #{tpu_custom_call.1} parent=31 // pred_check
          %p270 = pneg %p125
        $region38: #{tpu_custom_call.1} parent=31 // pred_check_branch
          %272 = sbr.rel (%p270) target = $region40
        $region39: #{tpu_custom_call.1} parent=31 // pred_region
          %274 = vsyncadd %s267, 0
          %s275 = sadd.s32 %s25, %s24
          %s276 = scalar_lea.hbm %s3, %s275
          %s278 = sshll.u32 %s269, 4
          %s279 = int_to_ptr.vmem [resolvable:$true] %s278
          %s280 = sshll.u32 %s276, 4
          %s281 = int_to_ptr.hbm [resolvable:$true] %s280
          %283 = dma.vmem_to_hbm [thread:$0]  %s279, 16, %s281, %s267
        $region40: #{tpu_custom_call.1} parent=31 // pred_fallthru
          _
      $region32: #{tpu_custom_call.1} parent=5 // pred_fallthru
        _
      %p284 = scmp.le.s32.totalorder 2, %s15
      // Predicated region
      $region41: #{tpu_custom_call.1} parent=5 // pred_check
        %p285 = pneg %p284
      $region42: #{tpu_custom_call.1} parent=5 // pred_check_branch
        %287 = sbr.rel (%p285) target = $region44
      $region43: #{tpu_custom_call.1} parent=5 // pred_region
        %s288 = ssub.s32 %s15, 2
        // Predicated region
        $region45: #{tpu_custom_call.1} parent=43 // pred_check
          %p289 = pneg %p131
        $region46: #{tpu_custom_call.1} parent=43 // pred_check_branch
          %291 = sbr.rel (%p289) target = $region48
        $region47: #{tpu_custom_call.1} parent=43 // pred_region
          %s292 = sand.u32 %s116, 1
          %s293 = scalar_lea.sflag [#allocation4], %s292
          %s294 = sand.u32 %s116, 1
          %s295 = scalar_lea.vmem [#allocation5], %s294
          %297 = dma.done %s293, 16
        $region48: #{tpu_custom_call.1} parent=43 // pred_fallthru
          _
      $region44: #{tpu_custom_call.1} parent=5 // pred_fallthru
        _
    $region6: #{tpu_custom_call.1} parent=1 // loop_footer
      %s19 = sadd.s32 1, %s15
    $region7: #{tpu_custom_call.1} parent=1 // loop_footer_branch
      %14 = sbr.rel target = $region3
    $region8: #{tpu_custom_call.1} parent=1 // loop_exit
      _
    %298 = vsyncpa [#allocation3], 1
    %s299 = scalar_lea.sflag [#allocation3], 1
    %300 = vsyncpa %s299, 1
    %301 = vsyncpa [#allocation4], 1
    %s302 = scalar_lea.sflag [#allocation4], 1
    %303 = vsyncpa %s302, 1

</llo_original>
